<compile_context>
chip_gen: v6e
topology: v6e:2x2x1
jax: 0.10.0
libtpu: 0.0.40
codegen_flags: <defaults>
</compile_context>

<pallas_src>
import jax
import jax.numpy as jnp
from jax import lax
from jax.experimental import pallas as pl
from jax.experimental.pallas import tpu as pltpu

RELU6_MAX = 6.0


def bn_fold(gamma, beta, mean, var, eps=1e-5):
    scale = gamma / jnp.sqrt(var + eps)
    shift = beta - mean * scale
    return scale, shift


def _pick_batch_tile(n, m):
    """Smallest divisor of n whose packed lane width (bt*m) reaches 128."""
    for bt in range(1, n + 1):
        if n % bt == 0 and bt * m >= 128:
            return bt
    return n


# --------------------------- fused kernel ---------------------------------
def _make_fused_kernel(wo: int, mb: int, cout: int):
    """Fused bottleneck for one packed block of B_t images.

    Channels-first throughout; the lane (last) dim is the packed spatial
    extent mb = B_t * Ho * Wo (>= 128 when possible -> lane-dense stores).
    """

    def kernel(xq_ref, w1t_ref, wdw_ref, wcb_ref, be_ref, bo_ref, mask_ref, o_ref):
        xall = xq_ref[0]                       # (Cin, 4*mb): quadrants A,B,C,D on lane
        w1t = w1t_ref[...]                     # (Cexp, Cin), BN1 scale folded in
        b1 = be_ref[0]                         # (Cexp, 1)
        b2 = be_ref[1]                         # (Cexp, 1)

        # --- expand 1x1 + bn1 + relu6: ONE MXU call for all four quadrants ---
        h_all = jnp.dot(w1t, xall, preferred_element_type=jnp.float32)
        h_all = jnp.clip(h_all + b1, 0.0, RELU6_MAX)        # (Cexp, 4*mb)

        ha = h_all[:, 0 * mb:1 * mb]           # h1 at (even row, even col)
        hb = h_all[:, 1 * mb:2 * mb]           # (even, odd)
        hc = h_all[:, 2 * mb:3 * mb]           # (odd,  even)
        hd = h_all[:, 3 * mb:4 * mb]           # (odd,  odd)
        a = xall[:, 0:mb]                      # quadrant A of x (bypass input)

        edge = mask_ref[0]                     # (1, mb): 0.0 at output col == 0 (per image)
        top = mask_ref[1]                      # (1, mb): 0.0 at output row == 0 (per image)

        # Shifted taps via XLU rotates + per-image masks (masks also kill the
        # wrap-around / cross-image elements the rotate brings in).
        def sh_c(v):                           # v[r, c-1], zero at c == 0
            return pltpu.roll(v, shift=1, axis=1) * edge

        def sh_r(v):                           # v[r-1, c], zero at r == 0
            return pltpu.roll(v, shift=wo, axis=1) * top

        # Depthwise 3x3 / stride-2 / pad-1 expressed on the parity quadrants:
        #   out[r,c] = w00*D[r-1,c-1] + w01*C[r-1,c] + w02*D[r-1,c]
        #            + w10*B[r,c-1]   + w11*A[r,c]   + w12*B[r,c]
        #            + w20*D[r,c-1]   + w21*C[r,c]   + w22*D[r,c]
        hd_r = sh_r(hd)
        w = lambda t: wdw_ref[t]               # (Cexp, 1), BN2 scale folded in

        # Balanced pairwise tree (4-wide VALU friendly).
        p0 = ha * w(4) + hb * w(5)
        p1 = sh_c(hb) * w(3) + hc * w(7)
        p2 = sh_r(hc) * w(1) + hd * w(8)
        p3 = sh_c(hd) * w(6) + hd_r * w(2)
        p4 = sh_c(hd_r) * w(0)
        h2 = jnp.clip(((p0 + p1) + (p2 + p3)) + p4 + b2, 0.0, RELU6_MAX)  # (Cexp, mb)

        # --- squeeze 1x1 + bn3 (linear)  ||  bypass 1x1/s2 + bn + relu6 ---
        # ONE MXU call: block-diagonal LHS [[w2t, 0], [0, wbt]], RHS [h2; A].
        rhs = jnp.concatenate([h2, a], axis=0)              # (Cexp+Cin, mb)
        out2 = jnp.dot(wcb_ref[...], rhs, preferred_element_type=jnp.float32)
        out2 = out2 + bo_ref[...]                           # (2*Cout, mb)
        main = out2[:cout]
        byp = jnp.clip(out2[cout:], 0.0, RELU6_MAX)
        # TODO(synk): nemo.quant.pact.PACT_IntegerAdd (quantized add) modeled as float add.
        o_ref[0] = main + byp                               # (Cout, mb), lane-dense store

    return kernel


# ----------------------------- wrapper ------------------------------------
def inverted_linear_bottleneck(x_nchw, params):
    x = x_nchw.astype(jnp.float32)                 # NCHW, like PyTorch
    N, Cin, H, W = x.shape
    assert H % 2 == 0 and W % 2 == 0, "stride-2 block expects even spatial dims"
    Ho, Wo = H // 2, W // 2
    M = Ho * Wo

    w1, w_dw, w2, wb = params["w1"], params["w_dw"], params["w2"], params["wb"]
    Cexp, Cout = w1.shape[1], w2.shape[1]
    s1, b1 = bn_fold(*params["bn1"])
    s2, b2 = bn_fold(*params["bn2"])
    s3, b3 = bn_fold(*params["bn3"])
    sb, bb = bn_fold(*params["bnb"])

    # Fold BN scales into conv weights (trace time); keep only the shifts.
    w1t = (w1 * s1[None, :]).T                                        # (Cexp, Cin)
    wdwf = (w_dw * s2[None, None, :]).reshape(9, Cexp)[:, :, None]    # (9, Cexp, 1)
    w2t = (w2 * s3[None, :]).T                                        # (Cout, Cexp)
    wbt = (wb * sb[None, :]).T                                        # (Cout, Cin)
    be = jnp.stack([b1, b2], axis=0)[:, :, None]                      # (2, Cexp, 1)

    # Fused squeeze + bypass weights: block-diagonal LHS, concatenated shifts.
    w_comb = jnp.zeros((2 * Cout, Cexp + Cin), jnp.float32)
    w_comb = w_comb.at[:Cout, :Cexp].set(w2t).at[Cout:, Cexp:].set(wbt)
    bo = jnp.concatenate([b3, bb])[:, None]                           # (2*Cout, 1)

    # Batch packing: put B_t images on the lane dim -> lane-dense vregs/stores.
    Bt = _pick_batch_tile(N, M)
    G = N // Bt
    Mb = Bt * M

    # Spatial parity quadrants of x, laid out (G, Cin, 4*Bt*M) with lane index
    # = q*(Bt*M) + b*M + s.  (Replaces any 9x-expanded taps tensor.)
    # TODO(synk): for large feature maps, avoid this extra HBM pass (input
    # fusion / in-kernel parity extraction) and tile M with a one-row halo,
    # re-deriving the tile against v7x's 64 MiB VMEM.
    xq = jnp.stack(
        [x[:, :, 0::2, 0::2], x[:, :, 0::2, 1::2],
         x[:, :, 1::2, 0::2], x[:, :, 1::2, 1::2]], axis=1
    ).reshape(G, Bt, 4, Cin, M)
    xq = xq.transpose(0, 3, 2, 1, 4).reshape(G, Cin, 4 * Mb)

    # Per-image masks over the packed lane dim (lane = b*M + s):
    #   edge: 0.0 where output col == 0 (left zero-pad of the dw conv)
    #   top : 0.0 where output row == 0 (top zero-pad; also blocks cross-image
    #         leakage from the roll-by-Wo shift)
    lane = jnp.arange(Mb, dtype=jnp.int32)
    edge_mask = (lane % Wo != 0).astype(jnp.float32)
    top_mask = ((lane % M) >= Wo).astype(jnp.float32)
    masks = jnp.stack([edge_mask, top_mask], axis=0)[:, None, :]      # (2, 1, Mb)

    kernel = _make_fused_kernel(Wo, Mb, Cout)
    out = pl.pallas_call(
        kernel,
        out_shape=jax.ShapeDtypeStruct((G, Cout, Mb), jnp.float32),
        grid_spec=pltpu.PrefetchScalarGridSpec(
            num_scalar_prefetch=0,
            grid=(G,),                                   # Bt images per grid step
            in_specs=[
                pl.BlockSpec((1, Cin, 4 * Mb), lambda g: (g, 0, 0)),
                pl.BlockSpec((Cexp, Cin), lambda g: (0, 0)),
                pl.BlockSpec((9, Cexp, 1), lambda g: (0, 0, 0)),
                pl.BlockSpec((2 * Cout, Cexp + Cin), lambda g: (0, 0)),
                pl.BlockSpec((2, Cexp, 1), lambda g: (0, 0, 0)),
                pl.BlockSpec((2 * Cout, 1), lambda g: (0, 0)),
                pl.BlockSpec((2, 1, Mb), lambda g: (0, 0, 0)),
            ],
            out_specs=pl.BlockSpec((1, Cout, Mb), lambda g: (g, 0, 0)),
        ),
        compiler_params=pltpu.CompilerParams(
            dimension_semantics=("parallel",),           # v7x: shard grid over 2 TCs
            vmem_limit_bytes=32 * 1024 * 1024,           # sized against v7x's 64 MiB VMEM
        ),
    )(xq, w1t, wdwf, w_comb, be, bo, masks)

    # (G, Cout, Bt*M) -> NCHW.  Wrapper-side layout plumbing only (no compute).
    out = out.reshape(G, Cout, Bt, Ho, Wo).transpose(0, 2, 1, 3, 4)
    return out.reshape(N, Cout, Ho, Wo)


# --------------------------- pure-JAX reference ---------------------------
def reference(x_nchw, params):
    x = jnp.transpose(x_nchw, (0, 2, 3, 1)).astype(jnp.float32)

    def bn(y, p):
        s, b = bn_fold(*p)
        return y * s + b

    h = jnp.einsum("nhwc,cd->nhwd", x, params["w1"])
    h = jnp.clip(bn(h, params["bn1"]), 0.0, RELU6_MAX)
    Cexp = h.shape[-1]
    h = lax.conv_general_dilated(
        h, params["w_dw"].reshape(3, 3, 1, Cexp),
        window_strides=(2, 2), padding=((1, 1), (1, 1)),
        dimension_numbers=("NHWC", "HWIO", "NHWC"),
        feature_group_count=Cexp)
    h = jnp.clip(bn(h, params["bn2"]), 0.0, RELU6_MAX)
    main = bn(jnp.einsum("nhwc,cd->nhwd", h, params["w2"]), params["bn3"])
    byp = jnp.einsum("nhwc,cd->nhwd", x[:, ::2, ::2, :], params["wb"])
    byp = jnp.clip(bn(byp, params["bnb"]), 0.0, RELU6_MAX)
    return jnp.transpose(main + byp, (0, 3, 1, 2))


# ----------------------------- param init ---------------------------------
def init_params(key, in_channels, out_channels, expand):
    cexp = in_channels * expand
    ks = jax.random.split(key, 12)

    def bn_params(k, c):
        k1, k2, k3, k4 = jax.random.split(k, 4)
        gamma = jax.random.uniform(k1, (c,), jnp.float32, 0.5, 1.5)
        beta = 0.1 * jax.random.normal(k2, (c,), jnp.float32)
        mean = 0.1 * jax.random.normal(k3, (c,), jnp.float32)
        var = jax.random.uniform(k4, (c,), jnp.float32, 0.5, 1.5)
        return (gamma, beta, mean, var)

    return {
        "w1":   0.3 * jax.random.normal(ks[0], (in_channels, cexp), jnp.float32),
        "w_dw": 0.3 * jax.random.normal(ks[1], (3, 3, cexp), jnp.float32),
        "w2":   0.3 * jax.random.normal(ks[2], (cexp, out_channels), jnp.float32),
        "wb":   0.3 * jax.random.normal(ks[3], (in_channels, out_channels), jnp.float32),
        "bn1": bn_params(ks[4], cexp),
        "bn2": bn_params(ks[5], cexp),
        "bn3": bn_params(ks[6], out_channels),
        "bnb": bn_params(ks[7], out_channels),
    }


if __name__ == "__main__":
    key = jax.random.PRNGKey(0)
    k_x, k_p = jax.random.split(key)

    N, Cin, H, W = 2, 4, 16, 16
    Cout, expand = 8, 4

    x = jax.random.normal(k_x, (N, Cin, H, W), jnp.float32)   # NCHW, like PyTorch
    params = init_params(k_p, Cin, Cout, expand)

    out = jax.block_until_ready(inverted_linear_bottleneck(x, params))
    ref = jax.block_until_ready(reference(x, params))

    assert out.shape == (N, Cout, H // 2, W // 2), out.shape
    err = float(jnp.max(jnp.abs(out - ref)))
    assert jnp.allclose(out, ref, atol=1e-3, rtol=1e-3), err

    print("KERNEL_OK")
</pallas_src>

<mosaic_0001>
module attributes {stable_mosaic.version = 11 : i64} {
  func.func @kernel(%arg0: i32, %arg1: memref<1x4x512xf32, #tpu.memory_space<vmem>>, %arg2: memref<16x4xf32, #tpu.memory_space<vmem>>, %arg3: memref<9x16x1xf32, #tpu.memory_space<vmem>>, %arg4: memref<16x20xf32, #tpu.memory_space<vmem>>, %arg5: memref<2x16x1xf32, #tpu.memory_space<vmem>>, %arg6: memref<16x1xf32, #tpu.memory_space<vmem>>, %arg7: memref<2x1x128xf32, #tpu.memory_space<vmem>>, %arg8: memref<1x8x128xf32, #tpu.memory_space<vmem>>) attributes {dimension_semantics = [#tpu.dimension_semantics<parallel>], iteration_bounds = array<i64: 1>, scalar_prefetch = 0 : i64, scratch_operands = 0 : i64, tpu.core_type = #tpu.core_type<tc>, window_params = [{transform_indices = @transform_0, window_bounds = array<i64: 1, 4, 512>}, {pipeline_mode = #tpu.pipeline_mode<synchronous>, transform_indices = @transform_1, window_bounds = array<i64: 16, 4>}, {pipeline_mode = #tpu.pipeline_mode<synchronous>, transform_indices = @transform_2, window_bounds = array<i64: 9, 16, 1>}, {pipeline_mode = #tpu.pipeline_mode<synchronous>, transform_indices = @transform_3, window_bounds = array<i64: 16, 20>}, {pipeline_mode = #tpu.pipeline_mode<synchronous>, transform_indices = @transform_4, window_bounds = array<i64: 2, 16, 1>}, {pipeline_mode = #tpu.pipeline_mode<synchronous>, transform_indices = @transform_5, window_bounds = array<i64: 16, 1>}, {pipeline_mode = #tpu.pipeline_mode<synchronous>, transform_indices = @transform_6, window_bounds = array<i64: 2, 1, 128>}, {transform_indices = @transform_7, window_bounds = array<i64: 1, 8, 128>}]} {
    %c0 = arith.constant 0 : index
    %c0_0 = arith.constant 0 : index
    %c0_1 = arith.constant 0 : index
    %0 = vector.load %arg1[%c0, %c0_0, %c0_1] : memref<1x4x512xf32, #tpu.memory_space<vmem>>, vector<1x4x512xf32>
    %1 = vector.shape_cast %0 : vector<1x4x512xf32> to vector<4x512xf32>
    %c0_2 = arith.constant 0 : index
    %c0_3 = arith.constant 0 : index
    %2 = vector.load %arg2[%c0_2, %c0_3] : memref<16x4xf32, #tpu.memory_space<vmem>>, vector<16x4xf32>
    %c0_4 = arith.constant 0 : index
    %c0_5 = arith.constant 0 : index
    %c0_6 = arith.constant 0 : index
    %3 = vector.load %arg5[%c0_4, %c0_5, %c0_6] : memref<2x16x1xf32, #tpu.memory_space<vmem>>, vector<1x16x1xf32>
    %4 = vector.shape_cast %3 : vector<1x16x1xf32> to vector<16x1xf32>
    %c1 = arith.constant 1 : index
    %c0_7 = arith.constant 0 : index
    %c0_8 = arith.constant 0 : index
    %5 = vector.load %arg5[%c1, %c0_7, %c0_8] : memref<2x16x1xf32, #tpu.memory_space<vmem>>, vector<1x16x1xf32>
    %6 = vector.shape_cast %5 : vector<1x16x1xf32> to vector<16x1xf32>
    %cst = arith.constant dense<0.000000e+00> : vector<16x512xf32>
    %7 = tpu.matmul %2, %1, %cst {dimension_numbers = #tpu.dot_dimension_numbers<[1], [0], [0], [1], [0, 0, 1, 1], [], []>} : vector<16x4xf32>, vector<4x512xf32>, vector<16x512xf32> -> vector<16x512xf32>
    %8 = vector.broadcast %4 : vector<16x1xf32> to vector<16x512xf32>
    %9 = arith.addf %7, %8 : vector<16x512xf32>
    %cst_9 = arith.constant 0.000000e+00 : f32
    %cst_10 = arith.constant 6.000000e+00 : f32
    %10 = vector.broadcast %cst_9 : f32 to vector<16x512xf32>
    %11 = arith.maximumf %10, %9 : vector<16x512xf32>
    %12 = vector.broadcast %cst_10 : f32 to vector<16x512xf32>
    %13 = arith.minimumf %12, %11 : vector<16x512xf32>
    %14 = vector.extract_strided_slice %13 {offsets = [0, 0], sizes = [16, 128], strides = [1, 1]} : vector<16x512xf32> to vector<16x128xf32>
    %15 = vector.extract_strided_slice %13 {offsets = [0, 128], sizes = [16, 128], strides = [1, 1]} : vector<16x512xf32> to vector<16x128xf32>
    %16 = vector.extract_strided_slice %13 {offsets = [0, 256], sizes = [16, 128], strides = [1, 1]} : vector<16x512xf32> to vector<16x128xf32>
    %17 = vector.extract_strided_slice %13 {offsets = [0, 384], sizes = [16, 128], strides = [1, 1]} : vector<16x512xf32> to vector<16x128xf32>
    %18 = vector.extract_strided_slice %1 {offsets = [0, 0], sizes = [4, 128], strides = [1, 1]} : vector<4x512xf32> to vector<4x128xf32>
    %c0_11 = arith.constant 0 : index
    %c0_12 = arith.constant 0 : index
    %c0_13 = arith.constant 0 : index
    %19 = vector.load %arg7[%c0_11, %c0_12, %c0_13] : memref<2x1x128xf32, #tpu.memory_space<vmem>>, vector<1x1x128xf32>
    %20 = vector.shape_cast %19 : vector<1x1x128xf32> to vector<1x128xf32>
    %c1_14 = arith.constant 1 : index
    %c0_15 = arith.constant 0 : index
    %c0_16 = arith.constant 0 : index
    %21 = vector.load %arg7[%c1_14, %c0_15, %c0_16] : memref<2x1x128xf32, #tpu.memory_space<vmem>>, vector<1x1x128xf32>
    %22 = vector.shape_cast %21 : vector<1x1x128xf32> to vector<1x128xf32>
    %c8_i32 = arith.constant 8 : i32
    %23 = tpu.dynamic_rotate %17 by %c8_i32 dim 1 : vector<16x128xf32>, i32 -> vector<16x128xf32>
    %24 = vector.broadcast %22 : vector<1x128xf32> to vector<16x128xf32>
    %25 = arith.mulf %23, %24 : vector<16x128xf32>
    %c4 = arith.constant 4 : index
    %c0_17 = arith.constant 0 : index
    %c0_18 = arith.constant 0 : index
    %26 = vector.load %arg3[%c4, %c0_17, %c0_18] : memref<9x16x1xf32, #tpu.memory_space<vmem>>, vector<1x16x1xf32>
    %27 = vector.shape_cast %26 : vector<1x16x1xf32> to vector<16x1xf32>
    %28 = vector.broadcast %27 : vector<16x1xf32> to vector<16x128xf32>
    %29 = arith.mulf %14, %28 : vector<16x128xf32>
    %c5 = arith.constant 5 : index
    %c0_19 = arith.constant 0 : index
    %c0_20 = arith.constant 0 : index
    %30 = vector.load %arg3[%c5, %c0_19, %c0_20] : memref<9x16x1xf32, #tpu.memory_space<vmem>>, vector<1x16x1xf32>
    %31 = vector.shape_cast %30 : vector<1x16x1xf32> to vector<16x1xf32>
    %32 = vector.broadcast %31 : vector<16x1xf32> to vector<16x128xf32>
    %33 = arith.mulf %15, %32 : vector<16x128xf32>
    %34 = arith.addf %29, %33 : vector<16x128xf32>
    %c1_i32 = arith.constant 1 : i32
    %35 = tpu.dynamic_rotate %15 by %c1_i32 dim 1 : vector<16x128xf32>, i32 -> vector<16x128xf32>
    %36 = vector.broadcast %20 : vector<1x128xf32> to vector<16x128xf32>
    %37 = arith.mulf %35, %36 : vector<16x128xf32>
    %c3 = arith.constant 3 : index
    %c0_21 = arith.constant 0 : index
    %c0_22 = arith.constant 0 : index
    %38 = vector.load %arg3[%c3, %c0_21, %c0_22] : memref<9x16x1xf32, #tpu.memory_space<vmem>>, vector<1x16x1xf32>
    %39 = vector.shape_cast %38 : vector<1x16x1xf32> to vector<16x1xf32>
    %40 = vector.broadcast %39 : vector<16x1xf32> to vector<16x128xf32>
    %41 = arith.mulf %37, %40 : vector<16x128xf32>
    %c7 = arith.constant 7 : index
    %c0_23 = arith.constant 0 : index
    %c0_24 = arith.constant 0 : index
    %42 = vector.load %arg3[%c7, %c0_23, %c0_24] : memref<9x16x1xf32, #tpu.memory_space<vmem>>, vector<1x16x1xf32>
    %43 = vector.shape_cast %42 : vector<1x16x1xf32> to vector<16x1xf32>
    %44 = vector.broadcast %43 : vector<16x1xf32> to vector<16x128xf32>
    %45 = arith.mulf %16, %44 : vector<16x128xf32>
    %46 = arith.addf %41, %45 : vector<16x128xf32>
    %c8_i32_25 = arith.constant 8 : i32
    %47 = tpu.dynamic_rotate %16 by %c8_i32_25 dim 1 : vector<16x128xf32>, i32 -> vector<16x128xf32>
    %48 = vector.broadcast %22 : vector<1x128xf32> to vector<16x128xf32>
    %49 = arith.mulf %47, %48 : vector<16x128xf32>
    %c1_26 = arith.constant 1 : index
    %c0_27 = arith.constant 0 : index
    %c0_28 = arith.constant 0 : index
    %50 = vector.load %arg3[%c1_26, %c0_27, %c0_28] : memref<9x16x1xf32, #tpu.memory_space<vmem>>, vector<1x16x1xf32>
    %51 = vector.shape_cast %50 : vector<1x16x1xf32> to vector<16x1xf32>
    %52 = vector.broadcast %51 : vector<16x1xf32> to vector<16x128xf32>
    %53 = arith.mulf %49, %52 : vector<16x128xf32>
    %c8 = arith.constant 8 : index
    %c0_29 = arith.constant 0 : index
    %c0_30 = arith.constant 0 : index
    %54 = vector.load %arg3[%c8, %c0_29, %c0_30] : memref<9x16x1xf32, #tpu.memory_space<vmem>>, vector<1x16x1xf32>
    %55 = vector.shape_cast %54 : vector<1x16x1xf32> to vector<16x1xf32>
    %56 = vector.broadcast %55 : vector<16x1xf32> to vector<16x128xf32>
    %57 = arith.mulf %17, %56 : vector<16x128xf32>
    %58 = arith.addf %53, %57 : vector<16x128xf32>
    %c1_i32_31 = arith.constant 1 : i32
    %59 = tpu.dynamic_rotate %17 by %c1_i32_31 dim 1 : vector<16x128xf32>, i32 -> vector<16x128xf32>
    %60 = vector.broadcast %20 : vector<1x128xf32> to vector<16x128xf32>
    %61 = arith.mulf %59, %60 : vector<16x128xf32>
    %c6 = arith.constant 6 : index
    %c0_32 = arith.constant 0 : index
    %c0_33 = arith.constant 0 : index
    %62 = vector.load %arg3[%c6, %c0_32, %c0_33] : memref<9x16x1xf32, #tpu.memory_space<vmem>>, vector<1x16x1xf32>
    %63 = vector.shape_cast %62 : vector<1x16x1xf32> to vector<16x1xf32>
    %64 = vector.broadcast %63 : vector<16x1xf32> to vector<16x128xf32>
    %65 = arith.mulf %61, %64 : vector<16x128xf32>
    %c2 = arith.constant 2 : index
    %c0_34 = arith.constant 0 : index
    %c0_35 = arith.constant 0 : index
    %66 = vector.load %arg3[%c2, %c0_34, %c0_35] : memref<9x16x1xf32, #tpu.memory_space<vmem>>, vector<1x16x1xf32>
    %67 = vector.shape_cast %66 : vector<1x16x1xf32> to vector<16x1xf32>
    %68 = vector.broadcast %67 : vector<16x1xf32> to vector<16x128xf32>
    %69 = arith.mulf %25, %68 : vector<16x128xf32>
    %70 = arith.addf %65, %69 : vector<16x128xf32>
    %c1_i32_36 = arith.constant 1 : i32
    %71 = tpu.dynamic_rotate %25 by %c1_i32_36 dim 1 : vector<16x128xf32>, i32 -> vector<16x128xf32>
    %72 = vector.broadcast %20 : vector<1x128xf32> to vector<16x128xf32>
    %73 = arith.mulf %71, %72 : vector<16x128xf32>
    %c0_37 = arith.constant 0 : index
    %c0_38 = arith.constant 0 : index
    %c0_39 = arith.constant 0 : index
    %74 = vector.load %arg3[%c0_37, %c0_38, %c0_39] : memref<9x16x1xf32, #tpu.memory_space<vmem>>, vector<1x16x1xf32>
    %75 = vector.shape_cast %74 : vector<1x16x1xf32> to vector<16x1xf32>
    %76 = vector.broadcast %75 : vector<16x1xf32> to vector<16x128xf32>
    %77 = arith.mulf %73, %76 : vector<16x128xf32>
    %78 = arith.addf %34, %46 : vector<16x128xf32>
    %79 = arith.addf %58, %70 : vector<16x128xf32>
    %80 = arith.addf %78, %79 : vector<16x128xf32>
    %81 = arith.addf %80, %77 : vector<16x128xf32>
    %82 = vector.broadcast %6 : vector<16x1xf32> to vector<16x128xf32>
    %83 = arith.addf %81, %82 : vector<16x128xf32>
    %cst_40 = arith.constant 0.000000e+00 : f32
    %cst_41 = arith.constant 6.000000e+00 : f32
    %84 = vector.broadcast %cst_40 : f32 to vector<16x128xf32>
    %85 = arith.maximumf %84, %83 : vector<16x128xf32>
    %86 = vector.broadcast %cst_41 : f32 to vector<16x128xf32>
    %87 = arith.minimumf %86, %85 : vector<16x128xf32>
    %88 = tpu.concatenate %87, %18 in 0 : vector<16x128xf32>, vector<4x128xf32> -> vector<20x128xf32>
    %c0_42 = arith.constant 0 : index
    %c0_43 = arith.constant 0 : index
    %89 = vector.load %arg4[%c0_42, %c0_43] : memref<16x20xf32, #tpu.memory_space<vmem>>, vector<16x20xf32>
    %cst_44 = arith.constant dense<0.000000e+00> : vector<16x128xf32>
    %90 = tpu.matmul %89, %88, %cst_44 {dimension_numbers = #tpu.dot_dimension_numbers<[1], [0], [0], [1], [0, 0, 1, 1], [], []>} : vector<16x20xf32>, vector<20x128xf32>, vector<16x128xf32> -> vector<16x128xf32>
    %c0_45 = arith.constant 0 : index
    %c0_46 = arith.constant 0 : index
    %91 = vector.load %arg6[%c0_45, %c0_46] : memref<16x1xf32, #tpu.memory_space<vmem>>, vector<16x1xf32>
    %92 = vector.broadcast %91 : vector<16x1xf32> to vector<16x128xf32>
    %93 = arith.addf %90, %92 : vector<16x128xf32>
    %94 = vector.extract_strided_slice %93 {offsets = [0, 0], sizes = [8, 128], strides = [1, 1]} : vector<16x128xf32> to vector<8x128xf32>
    %95 = vector.extract_strided_slice %93 {offsets = [8, 0], sizes = [8, 128], strides = [1, 1]} : vector<16x128xf32> to vector<8x128xf32>
    %cst_47 = arith.constant 0.000000e+00 : f32
    %cst_48 = arith.constant 6.000000e+00 : f32
    %96 = vector.broadcast %cst_47 : f32 to vector<8x128xf32>
    %97 = arith.maximumf %96, %95 : vector<8x128xf32>
    %98 = vector.broadcast %cst_48 : f32 to vector<8x128xf32>
    %99 = arith.minimumf %98, %97 : vector<8x128xf32>
    %100 = arith.addf %94, %99 : vector<8x128xf32>
    %c0_49 = arith.constant 0 : index
    %c0_50 = arith.constant 0 : index
    %c0_51 = arith.constant 0 : index
    %101 = vector.load %arg8[%c0_49, %c0_50, %c0_51] : memref<1x8x128xf32, #tpu.memory_space<vmem>>, vector<1x8x128xf32>
    %102 = vector.shape_cast %101 : vector<1x8x128xf32> to vector<8x128xf32>
    %103 = vector.shape_cast %100 : vector<8x128xf32> to vector<1x8x128xf32>
    tpu.vector_store %arg8[%c0_49, %c0_50, %c0_51], %103 {strides = array<i32>} : memref<1x8x128xf32, #tpu.memory_space<vmem>>, vector<1x8x128xf32>,
    return
  }
  func.func @transform_0(%arg0: i32) -> (i32, i32, i32) {
    %c0_i32 = arith.constant 0 : i32
    %c0_i32_0 = arith.constant 0 : i32
    %c0_i32_1 = arith.constant 0 : i32
    return %arg0, %c0_i32, %c0_i32_0 : i32, i32, i32
  }
  func.func @transform_1(%arg0: i32) -> (i32, i32) {
    %c0_i32 = arith.constant 0 : i32
    %c0_i32_0 = arith.constant 0 : i32
    %c0_i32_1 = arith.constant 0 : i32
    return %c0_i32, %c0_i32_0 : i32, i32
  }
  func.func @transform_2(%arg0: i32) -> (i32, i32, i32) {
    %c0_i32 = arith.constant 0 : i32
    %c0_i32_0 = arith.constant 0 : i32
    %c0_i32_1 = arith.constant 0 : i32
    %c0_i32_2 = arith.constant 0 : i32
    return %c0_i32, %c0_i32_0, %c0_i32_1 : i32, i32, i32
  }
  func.func @transform_3(%arg0: i32) -> (i32, i32) {
    %c0_i32 = arith.constant 0 : i32
    %c0_i32_0 = arith.constant 0 : i32
    %c0_i32_1 = arith.constant 0 : i32
    return %c0_i32, %c0_i32_0 : i32, i32
  }
  func.func @transform_4(%arg0: i32) -> (i32, i32, i32) {
    %c0_i32 = arith.constant 0 : i32
    %c0_i32_0 = arith.constant 0 : i32
    %c0_i32_1 = arith.constant 0 : i32
    %c0_i32_2 = arith.constant 0 : i32
    return %c0_i32, %c0_i32_0, %c0_i32_1 : i32, i32, i32
  }
  func.func @transform_5(%arg0: i32) -> (i32, i32) {
    %c0_i32 = arith.constant 0 : i32
    %c0_i32_0 = arith.constant 0 : i32
    %c0_i32_1 = arith.constant 0 : i32
    return %c0_i32, %c0_i32_0 : i32, i32
  }
  func.func @transform_6(%arg0: i32) -> (i32, i32, i32) {
    %c0_i32 = arith.constant 0 : i32
    %c0_i32_0 = arith.constant 0 : i32
    %c0_i32_1 = arith.constant 0 : i32
    %c0_i32_2 = arith.constant 0 : i32
    return %c0_i32, %c0_i32_0, %c0_i32_1 : i32, i32, i32
  }
  func.func @transform_7(%arg0: i32) -> (i32, i32, i32) {
    %c0_i32 = arith.constant 0 : i32
    %c0_i32_0 = arith.constant 0 : i32
    %c0_i32_1 = arith.constant 0 : i32
    return %arg0, %c0_i32, %c0_i32_0 : i32, i32, i32
  }
}

</mosaic_0001>

<llo_original>
// kernel: tpu_custom_call.1
$region0: #{tpu_custom_call.1}
  #allocation0 [shape = 'u32[]', space=smem, size = 0x4, offset = 0x4, fixed_abs, tag = 'smem constant byte address 0x4 - core index']
  #allocation1 [shape = 'u32[144,128]{1,0:T(1,128)}', space=vmem, size = 0x12000, scoped, tag = 'internal scratch']
  %s0 = inlined_call_operand.vmem [shape: f32[1,4,512], index: 0, kind: input, shape index: {}]
  %s1 = inlined_call_operand.vmem [shape: f32[16,4], index: 1, kind: input, shape index: {}]
  %s2 = inlined_call_operand.vmem [shape: f32[9,16,1], index: 2, kind: input, shape index: {}]
  %s3 = inlined_call_operand.vmem [shape: f32[16,20], index: 3, kind: input, shape index: {}]
  %s4 = inlined_call_operand.vmem [shape: f32[2,16,1], index: 4, kind: input, shape index: {}]
  %s5 = inlined_call_operand.vmem [shape: f32[16,1], index: 5, kind: input, shape index: {}]
  %s6 = inlined_call_operand.vmem [shape: f32[2,1,128], index: 6, kind: input, shape index: {}]
  %s7 = inlined_call_operand.hbm [shape: f32[1,8,128], index: 7, kind: output, shape index: {}]
  %s8 = sld [smem:[#allocation0]]
  $region38: #{tpu_custom_call.1} parent=0
    _
  %s10 = ssub.s32 1, %s8
  %s11 = scalar_select 0, %s10, %s8
  $region1: #{tpu_custom_call.1} parent=0
    #allocation2 [shape = 'u8[4096]{0}', space=vmem, size = 0x1000, scoped, tag = 'output window, operand 0, single buffered']
    #allocation3 [shape = 's32[1]{0}', space=sflag, size = 0x4, scoped, tag = 'scoped memory for tpu_custom_call.1']
    %12 = vsyncpa [#allocation3], 0
    // Predicated region
    $region2: #{tpu_custom_call.1} parent=1 // pred_check
      _
    $region3: #{tpu_custom_call.1} parent=1 // pred_check_branch
      %14 = sbr.rel (0) target = $region5
    $region4: #{tpu_custom_call.1} parent=1 // pred_region
      _
    $region5: #{tpu_custom_call.1} parent=1 // pred_fallthru
      _
    // Predicated region
    $region6: #{tpu_custom_call.1} parent=1 // pred_check
      _
    $region7: #{tpu_custom_call.1} parent=1 // pred_check_branch
      %16 = sbr.rel (0) target = $region9
    $region8: #{tpu_custom_call.1} parent=1 // pred_region
      _
    $region9: #{tpu_custom_call.1} parent=1 // pred_fallthru
      _
    // Predicated region
    $region10: #{tpu_custom_call.1} parent=1 // pred_check
      _
    $region11: #{tpu_custom_call.1} parent=1 // pred_check_branch
      %18 = sbr.rel (0) target = $region13
    $region12: #{tpu_custom_call.1} parent=1 // pred_region
      _
    $region13: #{tpu_custom_call.1} parent=1 // pred_fallthru
      _
    // Predicated region
    $region14: #{tpu_custom_call.1} parent=1 // pred_check
      _
    $region15: #{tpu_custom_call.1} parent=1 // pred_check_branch
      %20 = sbr.rel (0) target = $region17
    $region16: #{tpu_custom_call.1} parent=1 // pred_region
      _
    $region17: #{tpu_custom_call.1} parent=1 // pred_fallthru
      _
    // Predicated region
    $region18: #{tpu_custom_call.1} parent=1 // pred_check
      _
    $region19: #{tpu_custom_call.1} parent=1 // pred_check_branch
      %22 = sbr.rel (0) target = $region21
    $region20: #{tpu_custom_call.1} parent=1 // pred_region
      _
    $region21: #{tpu_custom_call.1} parent=1 // pred_fallthru
      _
    // Predicated region
    $region22: #{tpu_custom_call.1} parent=1 // pred_check
      _
    $region23: #{tpu_custom_call.1} parent=1 // pred_check_branch
      %24 = sbr.rel (0) target = $region25
    $region24: #{tpu_custom_call.1} parent=1 // pred_region
      _
    $region25: #{tpu_custom_call.1} parent=1 // pred_fallthru
      _
    // Predicated region
    $region26: #{tpu_custom_call.1} parent=1 // pred_check
      _
    $region27: #{tpu_custom_call.1} parent=1 // pred_check_branch
      %26 = sbr.rel (0) target = $region29
    $region28: #{tpu_custom_call.1} parent=1 // pred_region
      _
    $region29: #{tpu_custom_call.1} parent=1 // pred_fallthru
      _
    %v27 = vld [vmem:[%s0] sm:$0xff]
    %v28 = vld [vmem:[%s0 + $0x8] sm:$0xff]
    %v29 = vld [vmem:[%s1] sm:$0xff]
    %v30 = vld [vmem:[%s1 + $0x8] sm:$0xff]
    %v31 = vld [vmem:[%s4] sm:$0xff]
    %v32 = vld [vmem:[%s4 + $0x8] sm:$0xff]
    %s33 = scalar_lea.vmem %s4, 16
    %v34 = vld [vmem:[%s33] sm:$0xff]
    %v35 = vld [vmem:[%s33 + $0x8] sm:$0xff]
    %37 = vset.pattern.permute.xlu0 0
    %38 = vperm.xlu0 %37, %v31
    %v39 = vpop.permute.xlu0 %38
    %42 = vset.pattern.permute.xlu0 0
    %43 = vperm.xlu0 %42, %v32
    %v44 = vpop.permute.xlu0 %43
    %v48 = vcombine.high %v27, %v27
    %v49 = vcombine.high %v28, %v28
    %vm50 = vcmask 31744
    %v52 = vsel %vm50, %v29, 0
    %v55 = vsel %vm50, %v30, 0
    %vm57 = vcmask 1043456
    %v58 = vsel %vm57, %v27, 0
    %v60 = vsel %vm57, %v48, 0
    %v62 = vsel %vm57, %v28, 0
    %v64 = vsel %vm57, %v49, 0
    %66 = vmatprep.subr.mxu0 0.0
    %67 = vmatpush1.msra.mxu0 0.0
    %68 = vmatprep.subr.mxu0 0.0
    %69 = vmatpush1.msra.mxu0 0.0
    %70 = vmatprep.subr.mxu0 0.0
    %71 = vmatpush1.msra.mxu0 0.0
    %72 = vmatprep.subr.mxu0 0.0
    %73 = vmatpush1.msra.mxu0 0.0
    %74 = vmatprep.subr.mxu0 0.0
    %75 = vmatpush1.msra.mxu0 0.0
    %76 = vmatprep.subr.mxu0 0.0
    %77 = vmatpush1.msra.mxu0 0.0
    %78 = vmatprep.subr.mxu0 0.0
    %79 = vmatpush1.msra.mxu0 0.0
    %80 = vmatprep.subr.mxu0 0.0
    %81 = vmatpush1.msra.mxu0 0.0
    %82 = vmatprep.subr.mxu0 0.0
    %83 = vmatpush1.msra.mxu0 0.0
    %84 = vmatprep.subr.mxu0 0.0
    %85 = vmatpush1.msra.mxu0 0.0
    %86 = vmatprep.subr.mxu0 0.0
    %87 = vmatpush1.msra.mxu0 0.0
    %88 = vmatprep.subr.mxu0 0.0
    %89 = vmatpush1.msra.mxu0 0.0
    %90 = vmatprep.subr.mxu0 0.0
    %91 = vmatpush1.msra.mxu0 0.0
    %92 = vmatprep.subr.mxu0 0.0
    %93 = vmatpush1.msra.mxu0 0.0
    %94 = vmatprep.subr.mxu0 0.0
    %95 = vmatpush1.msra.mxu0 0.0
    %96 = vmatprep.subr.mxu0 %v60
    %97 = vmatpush1.msra.mxu0 %v58
    %98 = vmatprep.subr.mxu0 0.0
    %99 = vmatpush2.msra.mxu0 0.0
    %100 = vmatprep.subr.mxu0 0.0
    %101 = vmatpush2.msra.mxu0 0.0
    %102 = vmatprep.subr.mxu0 0.0
    %103 = vmatpush2.msra.mxu0 0.0
    %104 = vmatprep.subr.mxu0 0.0
    %105 = vmatpush2.msra.mxu0 0.0
    %106 = vmatprep.subr.mxu0 0.0
    %107 = vmatpush2.msra.mxu0 0.0
    %108 = vmatprep.subr.mxu0 0.0
    %109 = vmatpush2.msra.mxu0 0.0
    %110 = vmatprep.subr.mxu0 0.0
    %111 = vmatpush2.msra.mxu0 0.0
    %112 = vmatprep.subr.mxu0 0.0
    %113 = vmatpush2.msra.mxu0 0.0
    %114 = vmatprep.subr.mxu0 0.0
    %115 = vmatpush2.msra.mxu0 0.0
    %116 = vmatprep.subr.mxu0 0.0
    %117 = vmatpush2.msra.mxu0 0.0
    %118 = vmatprep.subr.mxu0 0.0
    %119 = vmatpush2.msra.mxu0 0.0
    %120 = vmatprep.subr.mxu0 0.0
    %121 = vmatpush2.msra.mxu0 0.0
    %122 = vmatprep.subr.mxu0 0.0
    %123 = vmatpush2.msra.mxu0 0.0
    %124 = vmatprep.subr.mxu0 0.0
    %125 = vmatpush2.msra.mxu0 0.0
    %126 = vmatprep.subr.mxu0 0.0
    %127 = vmatpush2.msra.mxu0 0.0
    %128 = vmatprep.subr.mxu0 0.0
    %129 = vmatpush2.msra.mxu0 0.0
    %130 = vmatprep.mubr.f32.mxu0 0.0
    %131 = vmatmul.mubr.f32.gmra.mxu0 %v52
    %v132 = vpop.f32.mrf.mxu0
    %v133 = vadd.f32 %v39, %v132
    %v134 = vpop.f32.mrf.mxu0
    %v135 = vadd.f32 %v39, %v134
    %136 = vmatprep.mubr.f32.mxu0 0.0
    %137 = vmatmul.mubr.f32.gmra.mxu0 %v55
    %v138 = vpop.f32.mrf.mxu0
    %v139 = vadd.f32 %v44, %v138
    %v140 = vpop.f32.mrf.mxu0
    %v141 = vadd.f32 %v44, %v140
    %142 = vdwg.mxu0
    %143 = vmatprep.subr.mxu0 0.0
    %144 = vmatpush1.msra.mxu0 0.0
    %145 = vmatprep.subr.mxu0 0.0
    %146 = vmatpush1.msra.mxu0 0.0
    %147 = vmatprep.subr.mxu0 0.0
    %148 = vmatpush1.msra.mxu0 0.0
    %149 = vmatprep.subr.mxu0 0.0
    %150 = vmatpush1.msra.mxu0 0.0
    %151 = vmatprep.subr.mxu0 0.0
    %152 = vmatpush1.msra.mxu0 0.0
    %153 = vmatprep.subr.mxu0 0.0
    %154 = vmatpush1.msra.mxu0 0.0
    %155 = vmatprep.subr.mxu0 0.0
    %156 = vmatpush1.msra.mxu0 0.0
    %157 = vmatprep.subr.mxu0 0.0
    %158 = vmatpush1.msra.mxu0 0.0
    %159 = vmatprep.subr.mxu0 0.0
    %160 = vmatpush1.msra.mxu0 0.0
    %161 = vmatprep.subr.mxu0 0.0
    %162 = vmatpush1.msra.mxu0 0.0
    %163 = vmatprep.subr.mxu0 0.0
    %164 = vmatpush1.msra.mxu0 0.0
    %165 = vmatprep.subr.mxu0 0.0
    %166 = vmatpush1.msra.mxu0 0.0
    %167 = vmatprep.subr.mxu0 0.0
    %168 = vmatpush1.msra.mxu0 0.0
    %169 = vmatprep.subr.mxu0 0.0
    %170 = vmatpush1.msra.mxu0 0.0
    %171 = vmatprep.subr.mxu0 0.0
    %172 = vmatpush1.msra.mxu0 0.0
    %173 = vmatprep.subr.mxu0 %v64
    %174 = vmatpush1.msra.mxu0 %v62
    %175 = vmatprep.subr.mxu0 0.0
    %176 = vmatpush2.msra.mxu0 0.0
    %177 = vmatprep.subr.mxu0 0.0
    %178 = vmatpush2.msra.mxu0 0.0
    %179 = vmatprep.subr.mxu0 0.0
    %180 = vmatpush2.msra.mxu0 0.0
    %181 = vmatprep.subr.mxu0 0.0
    %182 = vmatpush2.msra.mxu0 0.0
    %183 = vmatprep.subr.mxu0 0.0
    %184 = vmatpush2.msra.mxu0 0.0
    %185 = vmatprep.subr.mxu0 0.0
    %186 = vmatpush2.msra.mxu0 0.0
    %187 = vmatprep.subr.mxu0 0.0
    %188 = vmatpush2.msra.mxu0 0.0
    %189 = vmatprep.subr.mxu0 0.0
    %190 = vmatpush2.msra.mxu0 0.0
    %191 = vmatprep.subr.mxu0 0.0
    %192 = vmatpush2.msra.mxu0 0.0
    %193 = vmatprep.subr.mxu0 0.0
    %194 = vmatpush2.msra.mxu0 0.0
    %195 = vmatprep.subr.mxu0 0.0
    %196 = vmatpush2.msra.mxu0 0.0
    %197 = vmatprep.subr.mxu0 0.0
    %198 = vmatpush2.msra.mxu0 0.0
    %199 = vmatprep.subr.mxu0 0.0
    %200 = vmatpush2.msra.mxu0 0.0
    %201 = vmatprep.subr.mxu0 0.0
    %202 = vmatpush2.msra.mxu0 0.0
    %203 = vmatprep.subr.mxu0 0.0
    %204 = vmatpush2.msra.mxu0 0.0
    %205 = vmatprep.subr.mxu0 0.0
    %206 = vmatpush2.msra.mxu0 0.0
    %207 = vmatprep.mubr.f32.mxu0 0.0
    %208 = vmatmul.mubr.f32.gmra.mxu0 %v52
    %v209 = vpop.f32.mrf.mxu0
    %v210 = vadd.f32 %v39, %v209
    %v211 = vpop.f32.mrf.mxu0
    %v212 = vadd.f32 %v39, %v211
    %213 = vmatprep.mubr.f32.mxu0 0.0
    %214 = vmatmul.mubr.f32.gmra.mxu0 %v55
    %v215 = vpop.f32.mrf.mxu0
    %v216 = vadd.f32 %v44, %v215
    %v217 = vpop.f32.mrf.mxu0
    %v218 = vadd.f32 %v44, %v217
    %219 = vdwg.mxu0
    %v220 = vmax.f32 %v133, 0.0
    %v221 = vmax.f32 %v135, 0.0
    %v222 = vmax.f32 %v210, 0.0
    %v223 = vmax.f32 %v212, 0.0
    %v224 = vmax.f32 %v139, 0.0
    %v225 = vmax.f32 %v141, 0.0
    %v226 = vmax.f32 %v216, 0.0
    %v227 = vmax.f32 %v218, 0.0
    %v228 = vmin.f32 %v220, 6.0
    %v229 = vmin.f32 %v221, 6.0
    %v230 = vmin.f32 %v222, 6.0
    %v231 = vmin.f32 %v223, 6.0
    %v232 = vmin.f32 %v224, 6.0
    %v233 = vmin.f32 %v225, 6.0
    %v234 = vmin.f32 %v226, 6.0
    %v235 = vmin.f32 %v227, 6.0
    %v236 = vld [vmem:[%s6] sm:$0x1]
    %s237 = scalar_lea.vmem %s6, 1
    %v238 = vld [vmem:[%s237] sm:$0x1]
    %239 = vrot.lane.b32.xlu0 %v231, 8
    %v240 = vpop.permute.xlu0 %239
    %241 = vrot.lane.b32.xlu0 %v235, 8
    %v242 = vpop.permute.xlu0 %241
    %v244 = vlaneseq
    %v245 = vshrl.u32 %v244, 7
    %v246 = vsub.s32 0, %v245
    %v247 = vrot.slane %v238, %v246
    %v249 = vmul.f32 %v240, %v247
    %v250 = vmul.f32 %v242, %v247
    %s251 = scalar_lea.vmem %s2, 64
    %v252 = vld [vmem:[%s251] sm:$0xff]
    %v253 = vld [vmem:[%s251 + $0x8] sm:$0xff]
    %255 = vset.pattern.permute.xlu0 0
    %256 = vperm.xlu0 %255, %v252
    %v257 = vpop.permute.xlu0 %256
    %260 = vset.pattern.permute.xlu0 0
    %261 = vperm.xlu0 %260, %v253
    %v262 = vpop.permute.xlu0 %261
    %v264 = vmul.f32 %v228, %v257
    %v265 = vmul.f32 %v232, %v262
    %s266 = scalar_lea.vmem %s2, 80
    %v267 = vld [vmem:[%s266] sm:$0xff]
    %v268 = vld [vmem:[%s266 + $0x8] sm:$0xff]
    %270 = vset.pattern.permute.xlu0 0
    %271 = vperm.xlu0 %270, %v267
    %v272 = vpop.permute.xlu0 %271
    %275 = vset.pattern.permute.xlu0 0
    %276 = vperm.xlu0 %275, %v268
    %v277 = vpop.permute.xlu0 %276
    %v279 = vmul.f32 %v229, %v272
    %v280 = vmul.f32 %v233, %v277
    %v281 = vadd.f32 %v264, %v279
    %v282 = vadd.f32 %v265, %v280
    %283 = vrot.lane.b32.xlu0 %v229, 1
    %v284 = vpop.permute.xlu0 %283
    %285 = vrot.lane.b32.xlu0 %v233, 1
    %v286 = vpop.permute.xlu0 %285
    %v288 = vlaneseq
    %v289 = vshrl.u32 %v288, 7
    %v290 = vsub.s32 0, %v289
    %v291 = vrot.slane %v236, %v290
    %v293 = vmul.f32 %v284, %v291
    %v294 = vmul.f32 %v286, %v291
    %s295 = scalar_lea.vmem %s2, 48
    %v296 = vld [vmem:[%s295] sm:$0xff]
    %v297 = vld [vmem:[%s295 + $0x8] sm:$0xff]
    %299 = vset.pattern.permute.xlu0 0
    %300 = vperm.xlu0 %299, %v296
    %v301 = vpop.permute.xlu0 %300
    %304 = vset.pattern.permute.xlu0 0
    %305 = vperm.xlu0 %304, %v297
    %v306 = vpop.permute.xlu0 %305
    %v308 = vmul.f32 %v293, %v301
    %v309 = vmul.f32 %v294, %v306
    %s310 = scalar_lea.vmem %s2, 112
    %v311 = vld [vmem:[%s310] sm:$0xff]
    %v312 = vld [vmem:[%s310 + $0x8] sm:$0xff]
    %314 = vset.pattern.permute.xlu0 0
    %315 = vperm.xlu0 %314, %v311
    %v316 = vpop.permute.xlu0 %315
    %319 = vset.pattern.permute.xlu0 0
    %320 = vperm.xlu0 %319, %v312
    %v321 = vpop.permute.xlu0 %320
    %v323 = vmul.f32 %v230, %v316
    %v324 = vmul.f32 %v234, %v321
    %v325 = vadd.f32 %v308, %v323
    %v326 = vadd.f32 %v309, %v324
    %327 = vrot.lane.b32.xlu0 %v230, 8
    %v328 = vpop.permute.xlu0 %327
    %329 = vrot.lane.b32.xlu0 %v234, 8
    %v330 = vpop.permute.xlu0 %329
    %v331 = vmul.f32 %v328, %v247
    %v332 = vmul.f32 %v330, %v247
    %s333 = scalar_lea.vmem %s2, 16
    %v334 = vld [vmem:[%s333] sm:$0xff]
    %v335 = vld [vmem:[%s333 + $0x8] sm:$0xff]
    %337 = vset.pattern.permute.xlu0 0
    %338 = vperm.xlu0 %337, %v334
    %v339 = vpop.permute.xlu0 %338
    %342 = vset.pattern.permute.xlu0 0
    %343 = vperm.xlu0 %342, %v335
    %v344 = vpop.permute.xlu0 %343
    %v346 = vmul.f32 %v331, %v339
    %v347 = vmul.f32 %v332, %v344
    %s348 = scalar_lea.vmem %s2, 128
    %v349 = vld [vmem:[%s348] sm:$0xff]
    %v350 = vld [vmem:[%s348 + $0x8] sm:$0xff]
    %352 = vset.pattern.permute.xlu0 0
    %353 = vperm.xlu0 %352, %v349
    %v354 = vpop.permute.xlu0 %353
    %357 = vset.pattern.permute.xlu0 0
    %358 = vperm.xlu0 %357, %v350
    %v359 = vpop.permute.xlu0 %358
    %v361 = vmul.f32 %v231, %v354
    %v362 = vmul.f32 %v235, %v359
    %v363 = vadd.f32 %v346, %v361
    %v364 = vadd.f32 %v347, %v362
    %365 = vrot.lane.b32.xlu0 %v231, 1
    %v366 = vpop.permute.xlu0 %365
    %367 = vrot.lane.b32.xlu0 %v235, 1
    %v368 = vpop.permute.xlu0 %367
    %v369 = vmul.f32 %v366, %v291
    %v370 = vmul.f32 %v368, %v291
    %s371 = scalar_lea.vmem %s2, 96
    %v372 = vld [vmem:[%s371] sm:$0xff]
    %v373 = vld [vmem:[%s371 + $0x8] sm:$0xff]
    %375 = vset.pattern.permute.xlu0 0
    %376 = vperm.xlu0 %375, %v372
    %v377 = vpop.permute.xlu0 %376
    %380 = vset.pattern.permute.xlu0 0
    %381 = vperm.xlu0 %380, %v373
    %v382 = vpop.permute.xlu0 %381
    %v384 = vmul.f32 %v369, %v377
    %v385 = vmul.f32 %v370, %v382
    %s386 = scalar_lea.vmem %s2, 32
    %v387 = vld [vmem:[%s386] sm:$0xff]
    %v388 = vld [vmem:[%s386 + $0x8] sm:$0xff]
    %390 = vset.pattern.permute.xlu0 0
    %391 = vperm.xlu0 %390, %v387
    %v392 = vpop.permute.xlu0 %391
    %395 = vset.pattern.permute.xlu0 0
    %396 = vperm.xlu0 %395, %v388
    %v397 = vpop.permute.xlu0 %396
    %v399 = vmul.f32 %v249, %v392
    %v400 = vmul.f32 %v250, %v397
    %v401 = vadd.f32 %v384, %v399
    %v402 = vadd.f32 %v385, %v400
    %403 = vrot.lane.b32.xlu0 %v249, 1
    %v404 = vpop.permute.xlu0 %403
    %405 = vrot.lane.b32.xlu0 %v250, 1
    %v406 = vpop.permute.xlu0 %405
    %v407 = vmul.f32 %v404, %v291
    %v408 = vmul.f32 %v406, %v291
    %v409 = vld [vmem:[%s2] sm:$0xff]
    %v410 = vld [vmem:[%s2 + $0x8] sm:$0xff]
    %412 = vset.pattern.permute.xlu0 0
    %413 = vperm.xlu0 %412, %v409
    %v414 = vpop.permute.xlu0 %413
    %417 = vset.pattern.permute.xlu0 0
    %418 = vperm.xlu0 %417, %v410
    %v419 = vpop.permute.xlu0 %418
    %v421 = vmul.f32 %v407, %v414
    %v422 = vmul.f32 %v408, %v419
    %v423 = vadd.f32 %v281, %v325
    %v424 = vadd.f32 %v282, %v326
    %v425 = vadd.f32 %v363, %v401
    %v426 = vadd.f32 %v364, %v402
    %v427 = vadd.f32 %v423, %v425
    %v428 = vadd.f32 %v424, %v426
    %v429 = vadd.f32 %v427, %v421
    %v430 = vadd.f32 %v428, %v422
    %432 = vset.pattern.permute.xlu0 0
    %433 = vperm.xlu0 %432, %v34
    %v434 = vpop.permute.xlu0 %433
    %437 = vset.pattern.permute.xlu0 0
    %438 = vperm.xlu0 %437, %v35
    %v439 = vpop.permute.xlu0 %438
    %v441 = vadd.f32 %v429, %v434
    %v442 = vadd.f32 %v430, %v439
    %v443 = vmax.f32 %v441, 0.0
    %v444 = vmax.f32 %v442, 0.0
    %v445 = vmin.f32 %v443, 6.0
    %v446 = vmin.f32 %v444, 6.0
    %v447 = vld [vmem:[%s3] sm:$0xff]
    %v448 = vld [vmem:[%s3 + $0x8] sm:$0xff]
    %v449 = vld [vmem:[%s5] sm:$0xff]
    %v450 = vld [vmem:[%s5 + $0x8] sm:$0xff]
    %452 = vset.pattern.permute.xlu0 0
    %453 = vperm.xlu0 %452, %v449
    %v454 = vpop.permute.xlu0 %453
    %457 = vset.pattern.permute.xlu0 0
    %458 = vperm.xlu0 %457, %v450
    %v459 = vpop.permute.xlu0 %458
    %vm461 = vcmask 162816
    %v463 = vsel %vm461, %v447, 0
    %v466 = vsel %vm461, %v448, 0
    %468 = vmatprep.subr.mxu0 0.0
    %469 = vmatpush1.msra.mxu0 0.0
    %470 = vmatprep.subr.mxu0 0.0
    %471 = vmatpush1.msra.mxu0 0.0
    %472 = vmatprep.subr.mxu0 0.0
    %473 = vmatpush1.msra.mxu0 0.0
    %474 = vmatprep.subr.mxu0 0.0
    %475 = vmatpush1.msra.mxu0 0.0
    %476 = vmatprep.subr.mxu0 0.0
    %477 = vmatpush1.msra.mxu0 0.0
    %478 = vmatprep.subr.mxu0 0.0
    %479 = vmatpush1.msra.mxu0 0.0
    %480 = vmatprep.subr.mxu0 0.0
    %481 = vmatpush1.msra.mxu0 0.0
    %482 = vmatprep.subr.mxu0 0.0
    %483 = vmatpush1.msra.mxu0 0.0
    %484 = vmatprep.subr.mxu0 0.0
    %485 = vmatpush1.msra.mxu0 0.0
    %486 = vmatprep.subr.mxu0 0.0
    %487 = vmatpush1.msra.mxu0 0.0
    %488 = vmatprep.subr.mxu0 0.0
    %489 = vmatpush1.msra.mxu0 0.0
    %490 = vmatprep.subr.mxu0 0.0
    %491 = vmatpush1.msra.mxu0 0.0
    %492 = vmatprep.subr.mxu0 0.0
    %493 = vmatpush1.msra.mxu0 0.0
    %494 = vmatprep.subr.mxu0 0.0
    %495 = vmatpush1.msra.mxu0 %v58
    %496 = vmatprep.subr.mxu0 0.0
    %497 = vmatpush1.msra.mxu0 %v446
    %498 = vmatprep.subr.mxu0 0.0
    %499 = vmatpush1.msra.mxu0 %v445
    %500 = vmatprep.subr.mxu0 0.0
    %501 = vmatpush2.msra.mxu0 0.0
    %502 = vmatprep.subr.mxu0 0.0
    %503 = vmatpush2.msra.mxu0 0.0
    %504 = vmatprep.subr.mxu0 0.0
    %505 = vmatpush2.msra.mxu0 0.0
    %506 = vmatprep.subr.mxu0 0.0
    %507 = vmatpush2.msra.mxu0 0.0
    %508 = vmatprep.subr.mxu0 0.0
    %509 = vmatpush2.msra.mxu0 0.0
    %510 = vmatprep.subr.mxu0 0.0
    %511 = vmatpush2.msra.mxu0 0.0
    %512 = vmatprep.subr.mxu0 0.0
    %513 = vmatpush2.msra.mxu0 0.0
    %514 = vmatprep.subr.mxu0 0.0
    %515 = vmatpush2.msra.mxu0 0.0
    %516 = vmatprep.subr.mxu0 0.0
    %517 = vmatpush2.msra.mxu0 0.0
    %518 = vmatprep.subr.mxu0 0.0
    %519 = vmatpush2.msra.mxu0 0.0
    %520 = vmatprep.subr.mxu0 0.0
    %521 = vmatpush2.msra.mxu0 0.0
    %522 = vmatprep.subr.mxu0 0.0
    %523 = vmatpush2.msra.mxu0 0.0
    %524 = vmatprep.subr.mxu0 0.0
    %525 = vmatpush2.msra.mxu0 0.0
    %526 = vmatprep.subr.mxu0 0.0
    %527 = vmatpush2.msra.mxu0 0.0
    %528 = vmatprep.subr.mxu0 0.0
    %529 = vmatpush2.msra.mxu0 0.0
    %530 = vmatprep.subr.mxu0 0.0
    %531 = vmatpush2.msra.mxu0 0.0
    %532 = vmatprep.mubr.f32.mxu0 0.0
    %533 = vmatmul.mubr.f32.gmra.mxu0 %v463
    %v534 = vpop.f32.mrf.mxu0
    %v535 = vadd.f32 %v454, %v534
    %v536 = vpop.f32.mrf.mxu0
    %537 = vmatprep.mubr.f32.mxu0 0.0
    %538 = vmatmul.mubr.f32.gmra.mxu0 %v466
    %v539 = vpop.f32.mrf.mxu0
    %v540 = vadd.f32 %v459, %v539
    %v541 = vpop.f32.mrf.mxu0
    %542 = vdwg.mxu0
    %v543 = vmax.f32 %v540, 0.0
    %v544 = vmin.f32 %v543, 6.0
    %v545 = vadd.f32 %v535, %v544
    %546 = vst [vmem:[#allocation2] sm:$0xff] %v545
    // Predicated region
    $region30: #{tpu_custom_call.1} parent=1 // pred_check
      _
    $region31: #{tpu_custom_call.1} parent=1 // pred_check_branch
      %548 = sbr.rel (0) target = $region33
    $region32: #{tpu_custom_call.1} parent=1 // pred_region
      %s550 = ssub.s32 128, 128
      %551 = vsyncadd [#allocation3], %s550
      %s553 = sshll.u32 [#allocation2], 4
      %s554 = int_to_ptr.vmem [resolvable:$true] %s553
      %556 = dma.vmem_to_hbm [thread:$0]  %s554, 128, %s7, [#allocation3]
    $region33: #{tpu_custom_call.1} parent=1 // pred_fallthru
      _
    // Predicated region
    $region34: #{tpu_custom_call.1} parent=1 // pred_check
      _
    $region35: #{tpu_custom_call.1} parent=1 // pred_check_branch
      %558 = sbr.rel (0) target = $region37
    $region36: #{tpu_custom_call.1} parent=1 // pred_region
      %559 = dma.done [#allocation3], 128
    $region37: #{tpu_custom_call.1} parent=1 // pred_fallthru
      _
    %560 = vsyncpa [#allocation3], 1

</llo_original>
